<compile_context>
chip_gen: v7x
topology: tpu7x:2x2x1
jax: 0.10.0
libtpu: 0.0.40
codegen_flags: <defaults>
</compile_context>

<pallas_src>
import jax
import jax.numpy as jnp
from jax.experimental import pallas as pl
from jax.experimental.pallas import tpu as pltpu


# ---------------------------------------------------------------------------
# Kernel
# ---------------------------------------------------------------------------
def mlp_kernel(x_ref, w1_ref, b1_ref, w2_ref, b2_ref, w3_ref, b3_ref, o_ref):
    """One batch tile: three MXU matmuls + VPU bias/relu, f32 accumulation."""
    mm_dtype = w1_ref.dtype           # bf16 (fast path) or f32 (exact path)

    x = x_ref[...].astype(mm_dtype)                              # in-kernel cast (free)
    h1 = jnp.dot(x, w1_ref[...], preferred_element_type=jnp.float32)
    h1 = jnp.maximum(h1 + b1_ref[...], 0.0)                      # f32 elementwise

    h2 = jnp.dot(h1.astype(mm_dtype), w2_ref[...],
                 preferred_element_type=jnp.float32)
    h2 = jnp.maximum(h2 + b2_ref[...], 0.0)                      # f32 elementwise

    out = jnp.dot(h2.astype(mm_dtype), w3_ref[...],
                  preferred_element_type=jnp.float32)            # (TM, n_actions)
    o_ref[...] = (out + b3_ref[...]).astype(o_ref.dtype)         # compact store


# ---------------------------------------------------------------------------
# Helpers
# ---------------------------------------------------------------------------
def _round_up(x, m):
    return ((x + m - 1) // m) * m


def _pad2(a, rows, cols):
    r, c = a.shape
    if r == rows and c == cols:
        return a
    return jnp.pad(a, ((0, rows - r), (0, cols - c)))


# ---------------------------------------------------------------------------
# One-time parameter preparation (hoisted out of the per-call forward path)
# ---------------------------------------------------------------------------
def prepare_params(params, *, matmul_dtype=jnp.bfloat16):
    """Pad hidden dims to 128 lanes and cast weights once; cache the result.

    Zero padding keeps the math exact (padded weight rows/cols are zero and
    ReLU(0) = 0).  The output feature dim (n_actions) is NOT padded: the
    kernel writes a compact, n_actions-wide output.
    """
    w1, b1 = params["w1"], params["b1"]
    w2, b2 = params["w2"], params["b2"]
    w3, b3 = params["w3"], params["b3"]

    input_dims, fc1 = w1.shape
    fc2, n_actions = w3.shape
    H1 = _round_up(fc1, 128)
    H2 = _round_up(fc2, 128)

    return dict(
        w1=_pad2(w1, input_dims, H1).astype(matmul_dtype),
        b1=_pad2(b1, 1, H1).astype(jnp.float32),
        w2=_pad2(w2, H1, H2).astype(matmul_dtype),
        b2=_pad2(b2, 1, H2).astype(jnp.float32),
        w3=_pad2(w3, H2, n_actions).astype(matmul_dtype),
        b3=b3.astype(jnp.float32),
    )


# ---------------------------------------------------------------------------
# Forward wrapper
# ---------------------------------------------------------------------------
def mlp_forward(state, prepared, *, tm=1024):
    """state: [B, input_dims] float32. `prepared`: output of prepare_params."""
    w1, b1 = prepared["w1"], prepared["b1"]
    w2, b2 = prepared["w2"], prepared["b2"]
    w3, b3 = prepared["w3"], prepared["b3"]

    B, input_dims = state.shape
    H1 = w1.shape[1]
    H2 = w2.shape[1]
    n_actions = w3.shape[1]

    # Batch tile:
    #   * tiny batches -> one 8-row step (minimal latency),
    #   * otherwise cap at `tm` rows but guarantee >= 2 grid steps so the
    #     "parallel" batch axis splits across v7x's two TensorCores.
    if B <= 8:
        TM = 8
    else:
        TM = max(8, min(tm, _round_up(pl.cdiv(B, 2), 8)))
    Bp = _round_up(B, TM)
    xp = state if Bp == B else jnp.pad(state, ((0, Bp - B), (0, 0)))
    grid = (Bp // TM,)

    dsize = jnp.dtype(w1.dtype).itemsize
    flops = 2 * Bp * (input_dims * H1 + H1 * H2 + H2 * n_actions)
    bytes_accessed = (
        Bp * input_dims * 4                                        # state in
        + (input_dims * H1 + H1 * H2 + H2 * n_actions) * dsize     # weights
        + (H1 + H2 + n_actions) * 4                                # biases
        + Bp * n_actions * 4                                       # compact output
    )

    out = pl.pallas_call(
        mlp_kernel,
        out_shape=jax.ShapeDtypeStruct((Bp, n_actions), jnp.float32),
        grid=grid,
        in_specs=[
            # Batch-tiled activation stream.
            pl.BlockSpec((TM, input_dims), lambda i: (i, 0)),
            # Weights / biases: constant block index -> VMEM-resident.
            pl.BlockSpec((input_dims, H1), lambda i: (0, 0)),
            pl.BlockSpec((1, H1), lambda i: (0, 0)),
            pl.BlockSpec((H1, H2), lambda i: (0, 0)),
            pl.BlockSpec((1, H2), lambda i: (0, 0)),
            pl.BlockSpec((H2, n_actions), lambda i: (0, 0)),
            pl.BlockSpec((1, n_actions), lambda i: (0, 0)),
        ],
        # Compact output: block last dim == full array dim (n_actions).
        out_specs=pl.BlockSpec((TM, n_actions), lambda i: (i, 0)),
        compiler_params=pltpu.CompilerParams(
            dimension_semantics=("parallel",),
        ),
        cost_estimate=pl.CostEstimate(
            flops=flops, transcendentals=0, bytes_accessed=bytes_accessed
        ),
    )(xp, w1, b1, w2, b2, w3, b3)

    return out if Bp == B else out[:B]


# ---------------------------------------------------------------------------
# Parameter init (mimics PyTorch nn.Linear default U[-1/sqrt(fan_in), ...])
# ---------------------------------------------------------------------------
def init_params(key, input_dims, fc1_dims, fc2_dims, n_actions):
    def linear(k, fan_in, fan_out):
        kw, kb = jax.random.split(k)
        bound = 1.0 / jnp.sqrt(float(fan_in))
        w = jax.random.uniform(kw, (fan_in, fan_out), jnp.float32, -bound, bound)
        b = jax.random.uniform(kb, (1, fan_out), jnp.float32, -bound, bound)
        return w, b

    k1, k2, k3 = jax.random.split(key, 3)
    w1, b1 = linear(k1, input_dims, fc1_dims)
    w2, b2 = linear(k2, fc1_dims, fc2_dims)
    w3, b3 = linear(k3, fc2_dims, n_actions)
    return dict(w1=w1, b1=b1, w2=w2, b2=b2, w3=w3, b3=b3)


def mlp_reference(state, p):
    h1 = jnp.maximum(state @ p["w1"] + p["b1"], 0.0)
    h2 = jnp.maximum(h1 @ p["w2"] + p["b2"], 0.0)
    return h2 @ p["w3"] + p["b3"]


# TODO(synk): optimizer (Adam), MSELoss and device bookkeeping are training-side
# and are not part of the forward pass; only the forward is implemented here.

if __name__ == "__main__":
    batch = 8
    input_dims = 32
    fc1_dims = 64
    fc2_dims = 64
    n_actions = 4

    key = jax.random.PRNGKey(0)
    kx, kp, kx2 = jax.random.split(key, 3)
    state = jax.random.normal(kx, (batch, input_dims), jnp.float32)
    params = init_params(kp, input_dims, fc1_dims, fc2_dims, n_actions)
    ref = mlp_reference(state, params)

    # One-time prep (padding + cast); cache and reuse across forward calls.
    prep_f32 = prepare_params(params, matmul_dtype=jnp.float32)    # exact path
    prep_bf16 = prepare_params(params, matmul_dtype=jnp.bfloat16)  # fast path

    # Exact f32 MXU path.
    out_f32 = jax.block_until_ready(mlp_forward(state, prep_f32))
    assert out_f32.shape == (batch, n_actions)
    assert jnp.allclose(out_f32, ref, atol=1e-5, rtol=1e-5), "f32 mismatch"

    # Default bf16 MXU fast path (f32 accumulation) — relaxed tolerance.
    out_bf16 = jax.block_until_ready(mlp_forward(state, prep_bf16))
    assert out_bf16.shape == (batch, n_actions)
    assert jnp.allclose(out_bf16, ref, atol=3e-2, rtol=3e-2), "bf16 mismatch"

    # Larger, non-divisible batch exercises the tiled grid (>=2 steps) +
    # batch padding path.
    state_big = jax.random.normal(kx2, (600, input_dims), jnp.float32)
    out_big = jax.block_until_ready(mlp_forward(state_big, prep_bf16))
    ref_big = mlp_reference(state_big, params)
    assert out_big.shape == (600, n_actions)
    assert jnp.allclose(out_big, ref_big, atol=3e-2, rtol=3e-2), "big-batch mismatch"

    print("KERNEL_OK")
</pallas_src>

<mosaic_0001>
module attributes {stable_mosaic.version = 11 : i64} {
  func.func @mlp_kernel(%arg0: i32, %arg1: memref<8x32xf32, #tpu.memory_space<vmem>>, %arg2: memref<32x128xf32, #tpu.memory_space<vmem>>, %arg3: memref<1x128xf32, #tpu.memory_space<vmem>>, %arg4: memref<128x128xf32, #tpu.memory_space<vmem>>, %arg5: memref<1x128xf32, #tpu.memory_space<vmem>>, %arg6: memref<128x4xf32, #tpu.memory_space<vmem>>, %arg7: memref<1x4xf32, #tpu.memory_space<vmem>>, %arg8: memref<8x4xf32, #tpu.memory_space<vmem>>) attributes {dimension_semantics = [#tpu.dimension_semantics<parallel>], iteration_bounds = array<i64: 1>, scalar_prefetch = 0 : i64, scratch_operands = 0 : i64, tpu.core_type = #tpu.core_type<tc>, window_params = [{transform_indices = @transform_0, window_bounds = array<i64: 8, 32>}, {pipeline_mode = #tpu.pipeline_mode<synchronous>, transform_indices = @transform_1, window_bounds = array<i64: 32, 128>}, {pipeline_mode = #tpu.pipeline_mode<synchronous>, transform_indices = @transform_2, window_bounds = array<i64: 1, 128>}, {pipeline_mode = #tpu.pipeline_mode<synchronous>, transform_indices = @transform_3, window_bounds = array<i64: 128, 128>}, {pipeline_mode = #tpu.pipeline_mode<synchronous>, transform_indices = @transform_4, window_bounds = array<i64: 1, 128>}, {pipeline_mode = #tpu.pipeline_mode<synchronous>, transform_indices = @transform_5, window_bounds = array<i64: 128, 4>}, {pipeline_mode = #tpu.pipeline_mode<synchronous>, transform_indices = @transform_6, window_bounds = array<i64: 1, 4>}, {transform_indices = @transform_7, window_bounds = array<i64: 8, 4>}]} {
    %c0 = arith.constant 0 : index
    %c0_0 = arith.constant 0 : index
    %0 = vector.load %arg1[%c0, %c0_0] : memref<8x32xf32, #tpu.memory_space<vmem>>, vector<8x32xf32>
    %c0_1 = arith.constant 0 : index
    %c0_2 = arith.constant 0 : index
    %1 = vector.load %arg2[%c0_1, %c0_2] : memref<32x128xf32, #tpu.memory_space<vmem>>, vector<32x128xf32>
    %cst = arith.constant dense<0.000000e+00> : vector<8x128xf32>
    %2 = tpu.matmul %0, %1, %cst {dimension_numbers = #tpu.dot_dimension_numbers<[1], [0], [0], [1], [0, 0, 1, 1], [], []>} : vector<8x32xf32>, vector<32x128xf32>, vector<8x128xf32> -> vector<8x128xf32>
    %c0_3 = arith.constant 0 : index
    %c0_4 = arith.constant 0 : index
    %3 = vector.load %arg3[%c0_3, %c0_4] : memref<1x128xf32, #tpu.memory_space<vmem>>, vector<1x128xf32>
    %4 = vector.broadcast %3 : vector<1x128xf32> to vector<8x128xf32>
    %5 = arith.addf %2, %4 : vector<8x128xf32>
    %cst_5 = arith.constant 0.000000e+00 : f32
    %6 = vector.broadcast %cst_5 : f32 to vector<8x128xf32>
    %7 = arith.maximumf %5, %6 : vector<8x128xf32>
    %c0_6 = arith.constant 0 : index
    %c0_7 = arith.constant 0 : index
    %8 = vector.load %arg4[%c0_6, %c0_7] : memref<128x128xf32, #tpu.memory_space<vmem>>, vector<128x128xf32>
    %cst_8 = arith.constant dense<0.000000e+00> : vector<8x128xf32>
    %9 = tpu.matmul %7, %8, %cst_8 {dimension_numbers = #tpu.dot_dimension_numbers<[1], [0], [0], [1], [0, 0, 1, 1], [], []>} : vector<8x128xf32>, vector<128x128xf32>, vector<8x128xf32> -> vector<8x128xf32>
    %c0_9 = arith.constant 0 : index
    %c0_10 = arith.constant 0 : index
    %10 = vector.load %arg5[%c0_9, %c0_10] : memref<1x128xf32, #tpu.memory_space<vmem>>, vector<1x128xf32>
    %11 = vector.broadcast %10 : vector<1x128xf32> to vector<8x128xf32>
    %12 = arith.addf %9, %11 : vector<8x128xf32>
    %cst_11 = arith.constant 0.000000e+00 : f32
    %13 = vector.broadcast %cst_11 : f32 to vector<8x128xf32>
    %14 = arith.maximumf %12, %13 : vector<8x128xf32>
    %c0_12 = arith.constant 0 : index
    %c0_13 = arith.constant 0 : index
    %15 = vector.load %arg6[%c0_12, %c0_13] : memref<128x4xf32, #tpu.memory_space<vmem>>, vector<128x4xf32>
    %cst_14 = arith.constant dense<0.000000e+00> : vector<8x4xf32>
    %16 = tpu.matmul %14, %15, %cst_14 {dimension_numbers = #tpu.dot_dimension_numbers<[1], [0], [0], [1], [0, 0, 1, 1], [], []>} : vector<8x128xf32>, vector<128x4xf32>, vector<8x4xf32> -> vector<8x4xf32>
    %c0_15 = arith.constant 0 : index
    %c0_16 = arith.constant 0 : index
    %17 = vector.load %arg7[%c0_15, %c0_16] : memref<1x4xf32, #tpu.memory_space<vmem>>, vector<1x4xf32>
    %18 = vector.broadcast %17 : vector<1x4xf32> to vector<8x4xf32>
    %19 = arith.addf %16, %18 : vector<8x4xf32>
    %c0_17 = arith.constant 0 : index
    %c0_18 = arith.constant 0 : index
    %20 = vector.load %arg8[%c0_17, %c0_18] : memref<8x4xf32, #tpu.memory_space<vmem>>, vector<8x4xf32>
    tpu.vector_store %arg8[%c0_17, %c0_18], %19 {strides = array<i32>} : memref<8x4xf32, #tpu.memory_space<vmem>>, vector<8x4xf32>,
    return
  }
  func.func @transform_0(%arg0: i32) -> (i32, i32) {
    %c0_i32 = arith.constant 0 : i32
    %c0_i32_0 = arith.constant 0 : i32
    return %arg0, %c0_i32 : i32, i32
  }
  func.func @transform_1(%arg0: i32) -> (i32, i32) {
    %c0_i32 = arith.constant 0 : i32
    %c0_i32_0 = arith.constant 0 : i32
    %c0_i32_1 = arith.constant 0 : i32
    return %c0_i32, %c0_i32_0 : i32, i32
  }
  func.func @transform_2(%arg0: i32) -> (i32, i32) {
    %c0_i32 = arith.constant 0 : i32
    %c0_i32_0 = arith.constant 0 : i32
    %c0_i32_1 = arith.constant 0 : i32
    return %c0_i32, %c0_i32_0 : i32, i32
  }
  func.func @transform_3(%arg0: i32) -> (i32, i32) {
    %c0_i32 = arith.constant 0 : i32
    %c0_i32_0 = arith.constant 0 : i32
    %c0_i32_1 = arith.constant 0 : i32
    return %c0_i32, %c0_i32_0 : i32, i32
  }
  func.func @transform_4(%arg0: i32) -> (i32, i32) {
    %c0_i32 = arith.constant 0 : i32
    %c0_i32_0 = arith.constant 0 : i32
    %c0_i32_1 = arith.constant 0 : i32
    return %c0_i32, %c0_i32_0 : i32, i32
  }
  func.func @transform_5(%arg0: i32) -> (i32, i32) {
    %c0_i32 = arith.constant 0 : i32
    %c0_i32_0 = arith.constant 0 : i32
    %c0_i32_1 = arith.constant 0 : i32
    return %c0_i32, %c0_i32_0 : i32, i32
  }
  func.func @transform_6(%arg0: i32) -> (i32, i32) {
    %c0_i32 = arith.constant 0 : i32
    %c0_i32_0 = arith.constant 0 : i32
    %c0_i32_1 = arith.constant 0 : i32
    return %c0_i32, %c0_i32_0 : i32, i32
  }
  func.func @transform_7(%arg0: i32) -> (i32, i32) {
    %c0_i32 = arith.constant 0 : i32
    %c0_i32_0 = arith.constant 0 : i32
    return %arg0, %c0_i32 : i32, i32
  }
}

</mosaic_0001>

<llo_original>
// kernel: tpu_custom_call.1
$region0: #{tpu_custom_call.1}
  #allocation0 [shape = 'u32[]', space=smem, size = 0x4, offset = 0x4, fixed_abs, tag = 'smem constant byte address 0x4 - core index']
  #allocation1 [shape = 'u32[144,128]{1,0:T(1,128)}', space=vmem, size = 0x12000, scoped, tag = 'internal scratch']
  %s0 = inlined_call_operand.vmem [shape: f32[8,32], index: 0, kind: input, shape index: {}]
  %s1 = inlined_call_operand.hbm [shape: f32[32,128], index: 1, kind: input, shape index: {}]
  %s2 = inlined_call_operand.vmem [shape: f32[1,128], index: 2, kind: input, shape index: {}]
  %s3 = inlined_call_operand.vmem [shape: f32[128,128], index: 3, kind: input, shape index: {}]
  %s4 = inlined_call_operand.vmem [shape: f32[1,128], index: 4, kind: input, shape index: {}]
  %s5 = inlined_call_operand.vmem [shape: f32[128,4], index: 5, kind: input, shape index: {}]
  %s6 = inlined_call_operand.vmem [shape: f32[1,4], index: 6, kind: input, shape index: {}]
  %s7 = inlined_call_operand.vmem [shape: f32[8,4], index: 7, kind: output, shape index: {}]
  %s8 = sld [smem:[#allocation0]]
  $region42: #{tpu_custom_call.1} parent=0
    _
  %s10 = ssub.s32 1, %s8
  %s11 = scalar_select 0, %s10, %s8
  $region1: #{tpu_custom_call.1} parent=0
    #allocation2 [shape = 'u8[16384]{0}', space=vmem, size = 0x4000, scoped, tag = 'input window, operand 1, single buffered']
    #allocation3 [shape = 's32[1]{0}', space=sflag, size = 0x4, scoped, tag = 'scoped memory for tpu_custom_call.1']
    %12 = vsyncpa [#allocation3], 0
    // Predicated region
    $region2: #{tpu_custom_call.1} parent=1 // pred_check
      _
    $region3: #{tpu_custom_call.1} parent=1 // pred_check_branch
      %14 = sbr.rel (0) target = $region5
    $region4: #{tpu_custom_call.1} parent=1 // pred_region
      _
    $region5: #{tpu_custom_call.1} parent=1 // pred_fallthru
      _
    // Predicated region
    $region6: #{tpu_custom_call.1} parent=1 // pred_check
      _
    $region7: #{tpu_custom_call.1} parent=1 // pred_check_branch
      %16 = sbr.rel (0) target = $region9
    $region8: #{tpu_custom_call.1} parent=1 // pred_region
      %s18 = ssub.s32 512, 512
      %19 = vsyncadd [#allocation3], %s18
      %s20 = sshll.u32 [#allocation2], 4
      %s21 = int_to_ptr.vmem [resolvable:$true] %s20
      %26 = dma.hbm_to_vmem [thread:$0]  %s1, 512, %s21, [#allocation3], 128, 128, 8
    $region9: #{tpu_custom_call.1} parent=1 // pred_fallthru
      _
    // Predicated region
    $region10: #{tpu_custom_call.1} parent=1 // pred_check
      _
    $region11: #{tpu_custom_call.1} parent=1 // pred_check_branch
      %28 = sbr.rel (0) target = $region13
    $region12: #{tpu_custom_call.1} parent=1 // pred_region
      _
    $region13: #{tpu_custom_call.1} parent=1 // pred_fallthru
      _
    // Predicated region
    $region14: #{tpu_custom_call.1} parent=1 // pred_check
      _
    $region15: #{tpu_custom_call.1} parent=1 // pred_check_branch
      %30 = sbr.rel (0) target = $region17
    $region16: #{tpu_custom_call.1} parent=1 // pred_region
      _
    $region17: #{tpu_custom_call.1} parent=1 // pred_fallthru
      _
    // Predicated region
    $region18: #{tpu_custom_call.1} parent=1 // pred_check
      _
    $region19: #{tpu_custom_call.1} parent=1 // pred_check_branch
      %32 = sbr.rel (0) target = $region21
    $region20: #{tpu_custom_call.1} parent=1 // pred_region
      _
    $region21: #{tpu_custom_call.1} parent=1 // pred_fallthru
      _
    // Predicated region
    $region22: #{tpu_custom_call.1} parent=1 // pred_check
      _
    $region23: #{tpu_custom_call.1} parent=1 // pred_check_branch
      %34 = sbr.rel (0) target = $region25
    $region24: #{tpu_custom_call.1} parent=1 // pred_region
      _
    $region25: #{tpu_custom_call.1} parent=1 // pred_fallthru
      _
    // Predicated region
    $region26: #{tpu_custom_call.1} parent=1 // pred_check
      _
    $region27: #{tpu_custom_call.1} parent=1 // pred_check_branch
      %36 = sbr.rel (0) target = $region29
    $region28: #{tpu_custom_call.1} parent=1 // pred_region
      _
    $region29: #{tpu_custom_call.1} parent=1 // pred_fallthru
      _
    // Predicated region
    $region30: #{tpu_custom_call.1} parent=1 // pred_check
      _
    $region31: #{tpu_custom_call.1} parent=1 // pred_check_branch
      %38 = sbr.rel (0) target = $region33
    $region32: #{tpu_custom_call.1} parent=1 // pred_region
      %39 = dma.done [#allocation3], 512
    $region33: #{tpu_custom_call.1} parent=1 // pred_fallthru
      _
    %v40 = vld [vmem:[%s0] sm:$0xff]
    %v41 = vld [vmem:[#allocation2] sm:$0xff]
    %v42 = vld [vmem:[#allocation2 + $0x8] sm:$0xff]
    %v43 = vld [vmem:[#allocation2 + $0x10] sm:$0xff]
    %v44 = vld [vmem:[#allocation2 + $0x18] sm:$0xff]
    %v45 = vld [vmem:[%s2] sm:$0x1]
    %v47 = vlaneseq
    %v48 = vshrl.u32 %v47, 7
    %v49 = vsub.s32 0, %v48
    %v50 = vrot.slane %v45, %v49
    %vm52 = vcmask 261120
    %v54 = vsel %vm52, %v40, 0
    %56 = vmatprep.subr.mxu0 0.0
    %57 = vmatpush1.msra.mxu0 %v41
    %58 = vmatprep.subr.mxu0 0.0
    %59 = vmatpush1.msra.mxu0 %v42
    %60 = vmatprep.subr.mxu0 0.0
    %61 = vmatpush1.msra.mxu0 %v43
    %62 = vmatprep.subr.mxu0 0.0
    %63 = vmatpush1.msra.mxu0 %v44
    %64 = vmatprep.subr.mxu0 0.0
    %65 = vmatpush1.msra.mxu0 0.0
    %66 = vmatprep.subr.mxu0 0.0
    %67 = vmatpush1.msra.mxu0 0.0
    %68 = vmatprep.subr.mxu0 0.0
    %69 = vmatpush1.msra.mxu0 0.0
    %70 = vmatprep.subr.mxu0 0.0
    %71 = vmatpush1.msra.mxu0 0.0
    %72 = vmatprep.subr.mxu0 0.0
    %73 = vmatpush1.msra.mxu0 0.0
    %74 = vmatprep.subr.mxu0 0.0
    %75 = vmatpush1.msra.mxu0 0.0
    %76 = vmatprep.subr.mxu0 0.0
    %77 = vmatpush1.msra.mxu0 0.0
    %78 = vmatprep.subr.mxu0 0.0
    %79 = vmatpush1.msra.mxu0 0.0
    %80 = vmatprep.subr.mxu0 0.0
    %81 = vmatpush1.msra.mxu0 0.0
    %82 = vmatprep.subr.mxu0 0.0
    %83 = vmatpush1.msra.mxu0 0.0
    %84 = vmatprep.subr.mxu0 0.0
    %85 = vmatpush1.msra.mxu0 0.0
    %86 = vmatprep.subr.mxu0 0.0
    %87 = vmatpush1.msra.mxu0 0.0
    %88 = vmatprep.subr.mxu0 0.0
    %89 = vmatpush1.msra.mxu0 0.0
    %90 = vmatprep.subr.mxu0 0.0
    %91 = vmatpush1.msra.mxu0 0.0
    %92 = vmatprep.subr.mxu0 0.0
    %93 = vmatpush1.msra.mxu0 0.0
    %94 = vmatprep.subr.mxu0 0.0
    %95 = vmatpush1.msra.mxu0 0.0
    %96 = vmatprep.subr.mxu0 0.0
    %97 = vmatpush1.msra.mxu0 0.0
    %98 = vmatprep.subr.mxu0 0.0
    %99 = vmatpush1.msra.mxu0 0.0
    %100 = vmatprep.subr.mxu0 0.0
    %101 = vmatpush1.msra.mxu0 0.0
    %102 = vmatprep.subr.mxu0 0.0
    %103 = vmatpush1.msra.mxu0 0.0
    %104 = vmatprep.subr.mxu0 0.0
    %105 = vmatpush1.msra.mxu0 0.0
    %106 = vmatprep.subr.mxu0 0.0
    %107 = vmatpush1.msra.mxu0 0.0
    %108 = vmatprep.subr.mxu0 0.0
    %109 = vmatpush1.msra.mxu0 0.0
    %110 = vmatprep.subr.mxu0 0.0
    %111 = vmatpush1.msra.mxu0 0.0
    %112 = vmatprep.subr.mxu0 0.0
    %113 = vmatpush1.msra.mxu0 0.0
    %114 = vmatprep.subr.mxu0 0.0
    %115 = vmatpush1.msra.mxu0 0.0
    %116 = vmatprep.subr.mxu0 0.0
    %117 = vmatpush1.msra.mxu0 0.0
    %118 = vmatprep.subr.mxu0 0.0
    %119 = vmatpush1.msra.mxu0 0.0
    %120 = vmatprep.mubr.f32.mxu0 0.0
    %121 = vmatmul.mubr.f32.gmra.mrb[0].mxu0 %v54
    %v122 = vpop.f32.mrb[0].mxu0
    %v123 = vadd.f32 %v50, %v122
    %v124 = vpop.f32.mrb[0].mxu0
    %125 = vdwg.mxu0
    %v126 = vmax.f32 %v123, 0.0
    %v127 = vld [vmem:[%s3] sm:$0xff]
    %v128 = vld [vmem:[%s3 + $0x8] sm:$0xff]
    %v129 = vld [vmem:[%s3 + $0x10] sm:$0xff]
    %v130 = vld [vmem:[%s3 + $0x18] sm:$0xff]
    %v131 = vld [vmem:[%s3 + $0x20] sm:$0xff]
    %v132 = vld [vmem:[%s3 + $0x28] sm:$0xff]
    %v133 = vld [vmem:[%s3 + $0x30] sm:$0xff]
    %v134 = vld [vmem:[%s3 + $0x38] sm:$0xff]
    %v135 = vld [vmem:[%s3 + $0x40] sm:$0xff]
    %v136 = vld [vmem:[%s3 + $0x48] sm:$0xff]
    %v137 = vld [vmem:[%s3 + $0x50] sm:$0xff]
    %v138 = vld [vmem:[%s3 + $0x58] sm:$0xff]
    %v139 = vld [vmem:[%s3 + $0x60] sm:$0xff]
    %v140 = vld [vmem:[%s3 + $0x68] sm:$0xff]
    %v141 = vld [vmem:[%s3 + $0x70] sm:$0xff]
    %v142 = vld [vmem:[%s3 + $0x78] sm:$0xff]
    %v143 = vld [vmem:[%s4] sm:$0x1]
    %v145 = vlaneseq
    %v146 = vshrl.u32 %v145, 7
    %v147 = vsub.s32 0, %v146
    %v148 = vrot.slane %v143, %v147
    %150 = vmatprep.subr.mxu0 0.0
    %151 = vmatpush1.msra.mxu0 %v127
    %152 = vmatprep.subr.mxu0 0.0
    %153 = vmatpush1.msra.mxu0 %v128
    %154 = vmatprep.subr.mxu0 0.0
    %155 = vmatpush1.msra.mxu0 %v129
    %156 = vmatprep.subr.mxu0 0.0
    %157 = vmatpush1.msra.mxu0 %v130
    %158 = vmatprep.subr.mxu0 0.0
    %159 = vmatpush1.msra.mxu0 %v131
    %160 = vmatprep.subr.mxu0 0.0
    %161 = vmatpush1.msra.mxu0 %v132
    %162 = vmatprep.subr.mxu0 0.0
    %163 = vmatpush1.msra.mxu0 %v133
    %164 = vmatprep.subr.mxu0 0.0
    %165 = vmatpush1.msra.mxu0 %v134
    %166 = vmatprep.subr.mxu0 0.0
    %167 = vmatpush1.msra.mxu0 %v135
    %168 = vmatprep.subr.mxu0 0.0
    %169 = vmatpush1.msra.mxu0 %v136
    %170 = vmatprep.subr.mxu0 0.0
    %171 = vmatpush1.msra.mxu0 %v137
    %172 = vmatprep.subr.mxu0 0.0
    %173 = vmatpush1.msra.mxu0 %v138
    %174 = vmatprep.subr.mxu0 0.0
    %175 = vmatpush1.msra.mxu0 %v139
    %176 = vmatprep.subr.mxu0 0.0
    %177 = vmatpush1.msra.mxu0 %v140
    %178 = vmatprep.subr.mxu0 0.0
    %179 = vmatpush1.msra.mxu0 %v141
    %180 = vmatprep.subr.mxu0 0.0
    %181 = vmatpush1.msra.mxu0 %v142
    %182 = vmatprep.subr.mxu0 0.0
    %183 = vmatpush1.msra.mxu0 0.0
    %184 = vmatprep.subr.mxu0 0.0
    %185 = vmatpush1.msra.mxu0 0.0
    %186 = vmatprep.subr.mxu0 0.0
    %187 = vmatpush1.msra.mxu0 0.0
    %188 = vmatprep.subr.mxu0 0.0
    %189 = vmatpush1.msra.mxu0 0.0
    %190 = vmatprep.subr.mxu0 0.0
    %191 = vmatpush1.msra.mxu0 0.0
    %192 = vmatprep.subr.mxu0 0.0
    %193 = vmatpush1.msra.mxu0 0.0
    %194 = vmatprep.subr.mxu0 0.0
    %195 = vmatpush1.msra.mxu0 0.0
    %196 = vmatprep.subr.mxu0 0.0
    %197 = vmatpush1.msra.mxu0 0.0
    %198 = vmatprep.subr.mxu0 0.0
    %199 = vmatpush1.msra.mxu0 0.0
    %200 = vmatprep.subr.mxu0 0.0
    %201 = vmatpush1.msra.mxu0 0.0
    %202 = vmatprep.subr.mxu0 0.0
    %203 = vmatpush1.msra.mxu0 0.0
    %204 = vmatprep.subr.mxu0 0.0
    %205 = vmatpush1.msra.mxu0 0.0
    %206 = vmatprep.subr.mxu0 0.0
    %207 = vmatpush1.msra.mxu0 0.0
    %208 = vmatprep.subr.mxu0 0.0
    %209 = vmatpush1.msra.mxu0 0.0
    %210 = vmatprep.subr.mxu0 0.0
    %211 = vmatpush1.msra.mxu0 0.0
    %212 = vmatprep.subr.mxu0 0.0
    %213 = vmatpush1.msra.mxu0 0.0
    %214 = vmatprep.mubr.f32.mxu0 0.0
    %215 = vmatmul.mubr.f32.gmra.mrb[0].mxu0 %v126
    %v216 = vpop.f32.mrb[0].mxu0
    %v217 = vadd.f32 %v148, %v216
    %v218 = vpop.f32.mrb[0].mxu0
    %219 = vdwg.mxu0
    %v220 = vmax.f32 %v217, 0.0
    %v221 = vld [vmem:[%s5] sm:$0xff]
    %v222 = vld [vmem:[%s5 + $0x8] sm:$0xff]
    %v223 = vld [vmem:[%s5 + $0x10] sm:$0xff]
    %v224 = vld [vmem:[%s5 + $0x18] sm:$0xff]
    %v225 = vld [vmem:[%s5 + $0x20] sm:$0xff]
    %v226 = vld [vmem:[%s5 + $0x28] sm:$0xff]
    %v227 = vld [vmem:[%s5 + $0x30] sm:$0xff]
    %v228 = vld [vmem:[%s5 + $0x38] sm:$0xff]
    %v229 = vld [vmem:[%s5 + $0x40] sm:$0xff]
    %v230 = vld [vmem:[%s5 + $0x48] sm:$0xff]
    %v231 = vld [vmem:[%s5 + $0x50] sm:$0xff]
    %v232 = vld [vmem:[%s5 + $0x58] sm:$0xff]
    %v233 = vld [vmem:[%s5 + $0x60] sm:$0xff]
    %v234 = vld [vmem:[%s5 + $0x68] sm:$0xff]
    %v235 = vld [vmem:[%s5 + $0x70] sm:$0xff]
    %v236 = vld [vmem:[%s5 + $0x78] sm:$0xff]
    %v237 = vld [vmem:[%s6] sm:$0x1]
    %v239 = vlaneseq
    %v240 = vshrl.u32 %v239, 7
    %v241 = vsub.s32 0, %v240
    %v242 = vrot.slane %v237, %v241
    %244 = vmatprep.subr.mxu0 0.0
    %245 = vmatpush1.msra.mxu0 %v221
    %246 = vmatprep.subr.mxu0 0.0
    %247 = vmatpush1.msra.mxu0 %v222
    %248 = vmatprep.subr.mxu0 0.0
    %249 = vmatpush1.msra.mxu0 %v223
    %250 = vmatprep.subr.mxu0 0.0
    %251 = vmatpush1.msra.mxu0 %v224
    %252 = vmatprep.subr.mxu0 0.0
    %253 = vmatpush1.msra.mxu0 %v225
    %254 = vmatprep.subr.mxu0 0.0
    %255 = vmatpush1.msra.mxu0 %v226
    %256 = vmatprep.subr.mxu0 0.0
    %257 = vmatpush1.msra.mxu0 %v227
    %258 = vmatprep.subr.mxu0 0.0
    %259 = vmatpush1.msra.mxu0 %v228
    %260 = vmatprep.subr.mxu0 0.0
    %261 = vmatpush1.msra.mxu0 %v229
    %262 = vmatprep.subr.mxu0 0.0
    %263 = vmatpush1.msra.mxu0 %v230
    %264 = vmatprep.subr.mxu0 0.0
    %265 = vmatpush1.msra.mxu0 %v231
    %266 = vmatprep.subr.mxu0 0.0
    %267 = vmatpush1.msra.mxu0 %v232
    %268 = vmatprep.subr.mxu0 0.0
    %269 = vmatpush1.msra.mxu0 %v233
    %270 = vmatprep.subr.mxu0 0.0
    %271 = vmatpush1.msra.mxu0 %v234
    %272 = vmatprep.subr.mxu0 0.0
    %273 = vmatpush1.msra.mxu0 %v235
    %274 = vmatprep.subr.mxu0 0.0
    %275 = vmatpush1.msra.mxu0 %v236
    %276 = vmatprep.subr.mxu0 0.0
    %277 = vmatpush1.msra.mxu0 0.0
    %278 = vmatprep.subr.mxu0 0.0
    %279 = vmatpush1.msra.mxu0 0.0
    %280 = vmatprep.subr.mxu0 0.0
    %281 = vmatpush1.msra.mxu0 0.0
    %282 = vmatprep.subr.mxu0 0.0
    %283 = vmatpush1.msra.mxu0 0.0
    %284 = vmatprep.subr.mxu0 0.0
    %285 = vmatpush1.msra.mxu0 0.0
    %286 = vmatprep.subr.mxu0 0.0
    %287 = vmatpush1.msra.mxu0 0.0
    %288 = vmatprep.subr.mxu0 0.0
    %289 = vmatpush1.msra.mxu0 0.0
    %290 = vmatprep.subr.mxu0 0.0
    %291 = vmatpush1.msra.mxu0 0.0
    %292 = vmatprep.subr.mxu0 0.0
    %293 = vmatpush1.msra.mxu0 0.0
    %294 = vmatprep.subr.mxu0 0.0
    %295 = vmatpush1.msra.mxu0 0.0
    %296 = vmatprep.subr.mxu0 0.0
    %297 = vmatpush1.msra.mxu0 0.0
    %298 = vmatprep.subr.mxu0 0.0
    %299 = vmatpush1.msra.mxu0 0.0
    %300 = vmatprep.subr.mxu0 0.0
    %301 = vmatpush1.msra.mxu0 0.0
    %302 = vmatprep.subr.mxu0 0.0
    %303 = vmatpush1.msra.mxu0 0.0
    %304 = vmatprep.subr.mxu0 0.0
    %305 = vmatpush1.msra.mxu0 0.0
    %306 = vmatprep.subr.mxu0 0.0
    %307 = vmatpush1.msra.mxu0 0.0
    %308 = vmatprep.mubr.f32.mxu0 0.0
    %309 = vmatmul.mubr.f32.gmra.mrb[0].mxu0 %v220
    %v310 = vpop.f32.mrb[0].mxu0
    %v311 = vadd.f32 %v242, %v310
    %v312 = vpop.f32.mrb[0].mxu0
    %313 = vdwg.mxu0
    %vm314 = vcmask 31744
    %315 = vst.msk [vmem:[%s7] sm:$0xff] %vm314, %v311
    // Predicated region
    $region34: #{tpu_custom_call.1} parent=1 // pred_check
      _
    $region35: #{tpu_custom_call.1} parent=1 // pred_check_branch
      %317 = sbr.rel (0) target = $region37
    $region36: #{tpu_custom_call.1} parent=1 // pred_region
      _
    $region37: #{tpu_custom_call.1} parent=1 // pred_fallthru
      _
    // Predicated region
    $region38: #{tpu_custom_call.1} parent=1 // pred_check
      _
    $region39: #{tpu_custom_call.1} parent=1 // pred_check_branch
      %319 = sbr.rel (0) target = $region41
    $region40: #{tpu_custom_call.1} parent=1 // pred_region
      _
    $region41: #{tpu_custom_call.1} parent=1 // pred_fallthru
      _
    %320 = vsyncpa [#allocation3], 1

</llo_original>
